<compile_context>
chip_gen: v6e
topology: v6e:2x2x1
jax: 0.10.0
libtpu: 0.0.40
codegen_flags: <defaults>
</compile_context>

<pallas_src>
import jax
import jax.numpy as jnp
from jax import lax
from jax.experimental import pallas as pl
from jax.experimental.pallas import tpu as pltpu


def _round_up(x: int, m: int) -> int:
    return ((x + m - 1) // m) * m


def _resident_spec(block_shape, index_map):
    """BlockSpec for a grid-constant (resident) operand; single VMEM buffer."""
    try:
        return pl.BlockSpec(block_shape, index_map, pipeline_mode=pl.Buffered(1))
    except (AttributeError, TypeError):
        # Older jax without pipeline_mode/Buffered: fall back to default 2-buf.
        return pl.BlockSpec(block_shape, index_map)


def _linear_kernel(x_ref, w_ref, b_ref, o_ref):
    """o = x @ W^T + bias in a single MXU pass (everything VMEM-resident).

    x_ref: (bm, d_pad)    f32 batch tile
    w_ref: (c_pad, d_pad) f32 weight, PyTorch (C, D) layout (lane-dense on D)
    b_ref: (1, c_pad)     f32 bias row
    o_ref: (bm, c_pad)    f32 logits tile
    """
    o_ref[...] = (
        lax.dot_general(
            x_ref[...],
            w_ref[...],
            dimension_numbers=(((1,), (1,)), ((), ())),  # contract D with D
            preferred_element_type=jnp.float32,
        )
        + b_ref[...]
    ).astype(o_ref.dtype)


def prepare_linear_params(weight, bias):
    """One-time parameter prep (call once at load time, NOT per forward).

    Zero-pads the contraction dim D to a multiple of 128 (lanes) and the class
    dim C to a multiple of 8 (sublanes), and reshapes bias to a (1, c_pad) row.
    Zero padding is mathematically neutral; padded logits are sliced off in the
    forward wrapper.
    """
    c, d = int(weight.shape[0]), int(weight.shape[1])
    d_pad = _round_up(d, 128)
    c_pad = _round_up(max(c, 8), 8)
    w_p = jnp.pad(weight.astype(jnp.float32), ((0, c_pad - c), (0, d_pad - d)))
    b_p = jnp.pad(bias.astype(jnp.float32), (0, c_pad - c)).reshape(1, c_pad)
    return w_p, b_p


def linear_classifier_forward(x_nchw, w_prep, b_prep, *, num_classes, bm=256):
    """Forward: logits = flatten(x) @ W^T + bias.

    Args:
      x_nchw: (b, 3, H, W) float32 image batch.
      w_prep, b_prep: outputs of prepare_linear_params (padded, f32).
      num_classes: true number of classes (static).
      bm: preferred batch tile size (static; multiple of 8).
    Returns:
      (b, num_classes) float32 logits.

    Note: if x is ever fed as bf16, the MXU still accumulates in f32 but the
    stored logits follow x's dtype (intentional truncation at the store).
    """
    b = int(x_nchw.shape[0])
    d = 1
    for s in x_nchw.shape[1:]:
        d *= int(s)
    c_pad, d_pad = int(w_prep.shape[0]), int(w_prep.shape[1])

    # Flatten exactly like torch's x.view(b, -1) (row-major over C, H, W).
    x2d = x_nchw.reshape(b, d)
    if d_pad != d:  # zero-pad the contraction dim (neutral for the dot)
        x2d = jnp.pad(x2d, ((0, 0), (0, d_pad - d)))

    # Batch tiling: never pad the activation for b >= 8 (Pallas masks the
    # ragged last block); only micro-batches pad up to one 8-row block.
    if b < 8:
        x2d = jnp.pad(x2d, ((0, 8 - b), (0, 0)))
        b_rows = 8
    else:
        b_rows = b
    bm_eff = max(8, _round_up(min(bm, b_rows), 8))
    if b_rows >= 16:
        # Keep >= 2 grid steps so the "parallel" batch axis can split across
        # both TensorCores on v7x.
        bm_eff = min(bm_eff, _round_up(pl.cdiv(b_rows, 2), 8))
    bm_eff = min(bm_eff, (b_rows // 8) * 8)  # block never exceeds the array
    grid = (pl.cdiv(b_rows, bm_eff),)

    # VMEM budget: x double-buffered, weight/bias single-buffered, output
    # double-buffered (narrow-C tiles are lane-padded to 128 in VMEM).
    c_lane = _round_up(c_pad, 128)
    vmem_need = 4 * (2 * bm_eff * d_pad + c_pad * d_pad + 8 * c_lane
                     + 2 * bm_eff * c_lane)
    vmem_limit = int(min(max(2 * vmem_need, 32 * 1024 * 1024),
                         64 * 1024 * 1024))

    cost = pl.CostEstimate(
        flops=2 * b_rows * d_pad * c_pad,
        transcendentals=0,
        bytes_accessed=4 * (b_rows * d_pad + c_pad * d_pad + c_pad
                            + b_rows * c_pad),
    )

    out = pl.pallas_call(
        _linear_kernel,
        out_shape=jax.ShapeDtypeStruct((b_rows, c_pad), x2d.dtype),
        grid_spec=pltpu.PrefetchScalarGridSpec(
            num_scalar_prefetch=0,
            grid=grid,
            in_specs=[
                pl.BlockSpec((bm_eff, d_pad), lambda i: (i, 0)),   # x batch tile
                _resident_spec((c_pad, d_pad), lambda i: (0, 0)),  # weight
                _resident_spec((1, c_pad), lambda i: (0, 0)),      # bias
            ],
            out_specs=pl.BlockSpec((bm_eff, c_pad), lambda i: (i, 0)),
        ),
        compiler_params=pltpu.CompilerParams(
            dimension_semantics=("parallel",),  # batch axis: megacore-shardable
            vmem_limit_bytes=vmem_limit,
        ),
        cost_estimate=cost,
    )(x2d, w_prep, b_prep)

    return out[:b, :num_classes]


if __name__ == "__main__":
    # Small shapes consistent with the module: h=w=16, 3 channels, 6 classes.
    B, C_IN, H, W = 2, 3, 16, 16
    NUM_CLASSES = 6
    D = C_IN * H * W  # 768

    key = jax.random.PRNGKey(0)
    kx, kw, kb = jax.random.split(key, 3)

    x = jax.random.normal(kx, (B, C_IN, H, W), dtype=jnp.float32)
    # Deterministic synthetic parameters (PyTorch nn.Linear shapes).
    bound = 1.0 / (D ** 0.5)
    weight = jax.random.uniform(
        kw, (NUM_CLASSES, D), minval=-bound, maxval=bound, dtype=jnp.float32
    )
    bias = jax.random.uniform(
        kb, (NUM_CLASSES,), minval=-bound, maxval=bound, dtype=jnp.float32
    )

    # One-time parameter prep (all static pads happen here, not per call).
    w_prep, b_prep = prepare_linear_params(weight, bias)

    # Keep flatten/pad/slice inside the caller's jit alongside the kernel.
    fwd = jax.jit(linear_classifier_forward,
                  static_argnames=("num_classes", "bm"))
    logits = fwd(x, w_prep, b_prep, num_classes=NUM_CLASSES)
    jax.block_until_ready(logits)

    # Reference check in plain JAX (same math as torch: x.view(b,-1) @ W.T + b)
    ref = x.reshape(B, -1) @ weight.T + bias
    assert logits.shape == (B, NUM_CLASSES)
    assert jnp.allclose(logits, ref, atol=1e-4, rtol=1e-4)

    print("KERNEL_OK")
</pallas_src>

<mosaic_0001>
module attributes {stable_mosaic.version = 11 : i64} {
  func.func @_linear_kernel(%arg0: i32, %arg1: memref<8x768xf32, #tpu.memory_space<vmem>>, %arg2: memref<8x768xf32, #tpu.memory_space<vmem>>, %arg3: memref<1x8xf32, #tpu.memory_space<vmem>>, %arg4: memref<8x8xf32, #tpu.memory_space<vmem>>) attributes {dimension_semantics = [#tpu.dimension_semantics<parallel>], iteration_bounds = array<i64: 1>, scalar_prefetch = 0 : i64, scratch_operands = 0 : i64, tpu.core_type = #tpu.core_type<tc>, window_params = [{transform_indices = @transform_0, window_bounds = array<i64: 8, 768>}, {pipeline_mode = #tpu.pipeline_mode<synchronous>, transform_indices = @transform_1, window_bounds = array<i64: 8, 768>}, {pipeline_mode = #tpu.pipeline_mode<synchronous>, transform_indices = @transform_2, window_bounds = array<i64: 1, 8>}, {transform_indices = @transform_3, window_bounds = array<i64: 8, 8>}]} {
    %c0 = arith.constant 0 : index
    %c0_0 = arith.constant 0 : index
    %0 = vector.load %arg1[%c0, %c0_0] : memref<8x768xf32, #tpu.memory_space<vmem>>, vector<8x768xf32>
    %c0_1 = arith.constant 0 : index
    %c0_2 = arith.constant 0 : index
    %1 = vector.load %arg2[%c0_1, %c0_2] : memref<8x768xf32, #tpu.memory_space<vmem>>, vector<8x768xf32>
    %cst = arith.constant dense<0.000000e+00> : vector<8x8xf32>
    %2 = tpu.matmul %0, %1, %cst {dimension_numbers = #tpu.dot_dimension_numbers<[1], [1], [0], [0], [0, 0, 1, 0], [], []>} : vector<8x768xf32>, vector<8x768xf32>, vector<8x8xf32> -> vector<8x8xf32>
    %c0_3 = arith.constant 0 : index
    %c0_4 = arith.constant 0 : index
    %3 = vector.load %arg3[%c0_3, %c0_4] : memref<1x8xf32, #tpu.memory_space<vmem>>, vector<1x8xf32>
    %4 = vector.broadcast %3 : vector<1x8xf32> to vector<8x8xf32>
    %5 = arith.addf %2, %4 : vector<8x8xf32>
    %c0_5 = arith.constant 0 : index
    %c0_6 = arith.constant 0 : index
    %6 = vector.load %arg4[%c0_5, %c0_6] : memref<8x8xf32, #tpu.memory_space<vmem>>, vector<8x8xf32>
    tpu.vector_store %arg4[%c0_5, %c0_6], %5 {strides = array<i32>} : memref<8x8xf32, #tpu.memory_space<vmem>>, vector<8x8xf32>,
    return
  }
  func.func @transform_0(%arg0: i32) -> (i32, i32) {
    %c0_i32 = arith.constant 0 : i32
    %c0_i32_0 = arith.constant 0 : i32
    return %arg0, %c0_i32 : i32, i32
  }
  func.func @transform_1(%arg0: i32) -> (i32, i32) {
    %c0_i32 = arith.constant 0 : i32
    %c0_i32_0 = arith.constant 0 : i32
    %c0_i32_1 = arith.constant 0 : i32
    return %c0_i32, %c0_i32_0 : i32, i32
  }
  func.func @transform_2(%arg0: i32) -> (i32, i32) {
    %c0_i32 = arith.constant 0 : i32
    %c0_i32_0 = arith.constant 0 : i32
    %c0_i32_1 = arith.constant 0 : i32
    return %c0_i32, %c0_i32_0 : i32, i32
  }
  func.func @transform_3(%arg0: i32) -> (i32, i32) {
    %c0_i32 = arith.constant 0 : i32
    %c0_i32_0 = arith.constant 0 : i32
    return %arg0, %c0_i32 : i32, i32
  }
}

</mosaic_0001>

<llo_original>
// kernel: linear_classifier_forward.1
$region0: #{linear_classifier_forward.1}
  #allocation0 [shape = 'u32[]', space=smem, size = 0x4, offset = 0x4, fixed_abs, tag = 'smem constant byte address 0x4 - core index']
  #allocation1 [shape = 'u32[144,128]{1,0:T(1,128)}', space=vmem, size = 0x12000, scoped, tag = 'internal scratch']
  %s0 = inlined_call_operand.vmem [shape: f32[8,768], index: 0, kind: input, shape index: {}]
  %s1 = inlined_call_operand.vmem [shape: f32[8,768], index: 1, kind: input, shape index: {}]
  %s2 = inlined_call_operand.vmem [shape: f32[1,8], index: 2, kind: input, shape index: {}]
  %s3 = inlined_call_operand.vmem [shape: f32[8,8], index: 3, kind: output, shape index: {}]
  %s4 = sld [smem:[#allocation0]]
  $region22: #{linear_classifier_forward.1} parent=0
    _
  %s6 = ssub.s32 1, %s4
  %s7 = scalar_select 0, %s6, %s4
  // Predicated region
  $region2: #{linear_classifier_forward.1} parent=0 // pred_check
    _
  $region3: #{linear_classifier_forward.1} parent=0 // pred_check_branch
    %9 = sbr.rel (0) target = $region5
  $region4: #{linear_classifier_forward.1} parent=0 // pred_region
    _
  $region5: #{linear_classifier_forward.1} parent=0 // pred_fallthru
    _
  // Predicated region
  $region6: #{linear_classifier_forward.1} parent=0 // pred_check
    _
  $region7: #{linear_classifier_forward.1} parent=0 // pred_check_branch
    %11 = sbr.rel (0) target = $region9
  $region8: #{linear_classifier_forward.1} parent=0 // pred_region
    _
  $region9: #{linear_classifier_forward.1} parent=0 // pred_fallthru
    _
  // Predicated region
  $region10: #{linear_classifier_forward.1} parent=0 // pred_check
    _
  $region11: #{linear_classifier_forward.1} parent=0 // pred_check_branch
    %13 = sbr.rel (0) target = $region13
  $region12: #{linear_classifier_forward.1} parent=0 // pred_region
    _
  $region13: #{linear_classifier_forward.1} parent=0 // pred_fallthru
    _
  %v14 = vld [vmem:[%s0] sm:$0xff]
  %v15 = vld [vmem:[%s0 + $0x8] sm:$0xff]
  %v16 = vld [vmem:[%s0 + $0x10] sm:$0xff]
  %v17 = vld [vmem:[%s0 + $0x18] sm:$0xff]
  %v18 = vld [vmem:[%s0 + $0x20] sm:$0xff]
  %v19 = vld [vmem:[%s0 + $0x28] sm:$0xff]
  %v20 = vld [vmem:[%s1] sm:$0xff]
  %v21 = vld [vmem:[%s1 + $0x8] sm:$0xff]
  %v22 = vld [vmem:[%s1 + $0x10] sm:$0xff]
  %v23 = vld [vmem:[%s1 + $0x18] sm:$0xff]
  %v24 = vld [vmem:[%s1 + $0x20] sm:$0xff]
  %v25 = vld [vmem:[%s1 + $0x28] sm:$0xff]
  %v26 = vld [vmem:[%s2] sm:$0x1]
  %v28 = vlaneseq
  %v29 = vshrl.u32 %v28, 7
  %v30 = vsub.s32 0, %v29
  %v31 = vrot.slane %v26, %v30
  %33 = vmatprep.subr.mxu0 0.0
  %34 = vmatpush1.xpose.msra.mxu0 0.0
  %35 = vmatprep.subr.mxu0 0.0
  %36 = vmatpush1.xpose.msra.mxu0 0.0
  %37 = vmatprep.subr.mxu0 0.0
  %38 = vmatpush1.xpose.msra.mxu0 0.0
  %39 = vmatprep.subr.mxu0 0.0
  %40 = vmatpush1.xpose.msra.mxu0 0.0
  %41 = vmatprep.subr.mxu0 0.0
  %42 = vmatpush1.xpose.msra.mxu0 0.0
  %43 = vmatprep.subr.mxu0 0.0
  %44 = vmatpush1.xpose.msra.mxu0 0.0
  %45 = vmatprep.subr.mxu0 0.0
  %46 = vmatpush1.xpose.msra.mxu0 0.0
  %47 = vmatprep.subr.mxu0 0.0
  %48 = vmatpush1.xpose.msra.mxu0 0.0
  %49 = vmatprep.subr.mxu0 0.0
  %50 = vmatpush1.xpose.msra.mxu0 0.0
  %51 = vmatprep.subr.mxu0 0.0
  %52 = vmatpush1.xpose.msra.mxu0 0.0
  %53 = vmatprep.subr.mxu0 0.0
  %54 = vmatpush1.xpose.msra.mxu0 0.0
  %55 = vmatprep.subr.mxu0 0.0
  %56 = vmatpush1.xpose.msra.mxu0 0.0
  %57 = vmatprep.subr.mxu0 0.0
  %58 = vmatpush1.xpose.msra.mxu0 0.0
  %59 = vmatprep.subr.mxu0 0.0
  %60 = vmatpush1.xpose.msra.mxu0 0.0
  %61 = vmatprep.subr.mxu0 0.0
  %62 = vmatpush1.xpose.msra.mxu0 0.0
  %63 = vmatprep.subr.mxu0 %v21
  %64 = vmatpush1.xpose.msra.mxu0 %v20
  %65 = vmatprep.subr.mxu0 0.0
  %66 = vmatpush2.xpose.msra.mxu0 0.0
  %67 = vmatprep.subr.mxu0 0.0
  %68 = vmatpush2.xpose.msra.mxu0 0.0
  %69 = vmatprep.subr.mxu0 0.0
  %70 = vmatpush2.xpose.msra.mxu0 0.0
  %71 = vmatprep.subr.mxu0 0.0
  %72 = vmatpush2.xpose.msra.mxu0 0.0
  %73 = vmatprep.subr.mxu0 0.0
  %74 = vmatpush2.xpose.msra.mxu0 0.0
  %75 = vmatprep.subr.mxu0 0.0
  %76 = vmatpush2.xpose.msra.mxu0 0.0
  %77 = vmatprep.subr.mxu0 0.0
  %78 = vmatpush2.xpose.msra.mxu0 0.0
  %79 = vmatprep.subr.mxu0 0.0
  %80 = vmatpush2.xpose.msra.mxu0 0.0
  %81 = vmatprep.subr.mxu0 0.0
  %82 = vmatpush2.xpose.msra.mxu0 0.0
  %83 = vmatprep.subr.mxu0 0.0
  %84 = vmatpush2.xpose.msra.mxu0 0.0
  %85 = vmatprep.subr.mxu0 0.0
  %86 = vmatpush2.xpose.msra.mxu0 0.0
  %87 = vmatprep.subr.mxu0 0.0
  %88 = vmatpush2.xpose.msra.mxu0 0.0
  %89 = vmatprep.subr.mxu0 0.0
  %90 = vmatpush2.xpose.msra.mxu0 0.0
  %91 = vmatprep.subr.mxu0 0.0
  %92 = vmatpush2.xpose.msra.mxu0 0.0
  %93 = vmatprep.subr.mxu0 0.0
  %94 = vmatpush2.xpose.msra.mxu0 0.0
  %95 = vmatprep.subr.mxu0 0.0
  %96 = vmatpush2.xpose.msra.mxu0 0.0
  %97 = vmatprep.mubr.f32.mxu0 %v15
  %98 = vmatmul.mubr.f32.gmra.mxu0 %v14
  %v99 = vpop.f32.mrf.mxu0
  %v100 = vadd.f32 %v31, %v99
  %v101 = vpop.f32.mrf.mxu0
  %102 = vdwg.mxu0
  %103 = vmatprep.subr.mxu0 0.0
  %104 = vmatpush1.xpose.msra.mxu0 0.0
  %105 = vmatprep.subr.mxu0 0.0
  %106 = vmatpush1.xpose.msra.mxu0 0.0
  %107 = vmatprep.subr.mxu0 0.0
  %108 = vmatpush1.xpose.msra.mxu0 0.0
  %109 = vmatprep.subr.mxu0 0.0
  %110 = vmatpush1.xpose.msra.mxu0 0.0
  %111 = vmatprep.subr.mxu0 0.0
  %112 = vmatpush1.xpose.msra.mxu0 0.0
  %113 = vmatprep.subr.mxu0 0.0
  %114 = vmatpush1.xpose.msra.mxu0 0.0
  %115 = vmatprep.subr.mxu0 0.0
  %116 = vmatpush1.xpose.msra.mxu0 0.0
  %117 = vmatprep.subr.mxu0 0.0
  %118 = vmatpush1.xpose.msra.mxu0 0.0
  %119 = vmatprep.subr.mxu0 0.0
  %120 = vmatpush1.xpose.msra.mxu0 0.0
  %121 = vmatprep.subr.mxu0 0.0
  %122 = vmatpush1.xpose.msra.mxu0 0.0
  %123 = vmatprep.subr.mxu0 0.0
  %124 = vmatpush1.xpose.msra.mxu0 0.0
  %125 = vmatprep.subr.mxu0 0.0
  %126 = vmatpush1.xpose.msra.mxu0 0.0
  %127 = vmatprep.subr.mxu0 0.0
  %128 = vmatpush1.xpose.msra.mxu0 0.0
  %129 = vmatprep.subr.mxu0 0.0
  %130 = vmatpush1.xpose.msra.mxu0 0.0
  %131 = vmatprep.subr.mxu0 0.0
  %132 = vmatpush1.xpose.msra.mxu0 0.0
  %133 = vmatprep.subr.mxu0 %v23
  %134 = vmatpush1.xpose.msra.mxu0 %v22
  %135 = vmatprep.subr.mxu0 0.0
  %136 = vmatpush2.xpose.msra.mxu0 0.0
  %137 = vmatprep.subr.mxu0 0.0
  %138 = vmatpush2.xpose.msra.mxu0 0.0
  %139 = vmatprep.subr.mxu0 0.0
  %140 = vmatpush2.xpose.msra.mxu0 0.0
  %141 = vmatprep.subr.mxu0 0.0
  %142 = vmatpush2.xpose.msra.mxu0 0.0
  %143 = vmatprep.subr.mxu0 0.0
  %144 = vmatpush2.xpose.msra.mxu0 0.0
  %145 = vmatprep.subr.mxu0 0.0
  %146 = vmatpush2.xpose.msra.mxu0 0.0
  %147 = vmatprep.subr.mxu0 0.0
  %148 = vmatpush2.xpose.msra.mxu0 0.0
  %149 = vmatprep.subr.mxu0 0.0
  %150 = vmatpush2.xpose.msra.mxu0 0.0
  %151 = vmatprep.subr.mxu0 0.0
  %152 = vmatpush2.xpose.msra.mxu0 0.0
  %153 = vmatprep.subr.mxu0 0.0
  %154 = vmatpush2.xpose.msra.mxu0 0.0
  %155 = vmatprep.subr.mxu0 0.0
  %156 = vmatpush2.xpose.msra.mxu0 0.0
  %157 = vmatprep.subr.mxu0 0.0
  %158 = vmatpush2.xpose.msra.mxu0 0.0
  %159 = vmatprep.subr.mxu0 0.0
  %160 = vmatpush2.xpose.msra.mxu0 0.0
  %161 = vmatprep.subr.mxu0 0.0
  %162 = vmatpush2.xpose.msra.mxu0 0.0
  %163 = vmatprep.subr.mxu0 0.0
  %164 = vmatpush2.xpose.msra.mxu0 0.0
  %165 = vmatprep.subr.mxu0 0.0
  %166 = vmatpush2.xpose.msra.mxu0 0.0
  %167 = vmatprep.mubr.f32.mxu0 %v17
  %168 = vmatmul.mubr.f32.gmra.mxu0 %v16
  %v169 = vpop.f32.mrf.mxu0
  %v170 = vadd.f32 %v100, %v169
  %v171 = vpop.f32.mrf.mxu0
  %172 = vdwg.mxu0
  %173 = vmatprep.subr.mxu0 0.0
  %174 = vmatpush1.xpose.msra.mxu0 0.0
  %175 = vmatprep.subr.mxu0 0.0
  %176 = vmatpush1.xpose.msra.mxu0 0.0
  %177 = vmatprep.subr.mxu0 0.0
  %178 = vmatpush1.xpose.msra.mxu0 0.0
  %179 = vmatprep.subr.mxu0 0.0
  %180 = vmatpush1.xpose.msra.mxu0 0.0
  %181 = vmatprep.subr.mxu0 0.0
  %182 = vmatpush1.xpose.msra.mxu0 0.0
  %183 = vmatprep.subr.mxu0 0.0
  %184 = vmatpush1.xpose.msra.mxu0 0.0
  %185 = vmatprep.subr.mxu0 0.0
  %186 = vmatpush1.xpose.msra.mxu0 0.0
  %187 = vmatprep.subr.mxu0 0.0
  %188 = vmatpush1.xpose.msra.mxu0 0.0
  %189 = vmatprep.subr.mxu0 0.0
  %190 = vmatpush1.xpose.msra.mxu0 0.0
  %191 = vmatprep.subr.mxu0 0.0
  %192 = vmatpush1.xpose.msra.mxu0 0.0
  %193 = vmatprep.subr.mxu0 0.0
  %194 = vmatpush1.xpose.msra.mxu0 0.0
  %195 = vmatprep.subr.mxu0 0.0
  %196 = vmatpush1.xpose.msra.mxu0 0.0
  %197 = vmatprep.subr.mxu0 0.0
  %198 = vmatpush1.xpose.msra.mxu0 0.0
  %199 = vmatprep.subr.mxu0 0.0
  %200 = vmatpush1.xpose.msra.mxu0 0.0
  %201 = vmatprep.subr.mxu0 0.0
  %202 = vmatpush1.xpose.msra.mxu0 0.0
  %203 = vmatprep.subr.mxu0 %v25
  %204 = vmatpush1.xpose.msra.mxu0 %v24
  %205 = vmatprep.subr.mxu0 0.0
  %206 = vmatpush2.xpose.msra.mxu0 0.0
  %207 = vmatprep.subr.mxu0 0.0
  %208 = vmatpush2.xpose.msra.mxu0 0.0
  %209 = vmatprep.subr.mxu0 0.0
  %210 = vmatpush2.xpose.msra.mxu0 0.0
  %211 = vmatprep.subr.mxu0 0.0
  %212 = vmatpush2.xpose.msra.mxu0 0.0
  %213 = vmatprep.subr.mxu0 0.0
  %214 = vmatpush2.xpose.msra.mxu0 0.0
  %215 = vmatprep.subr.mxu0 0.0
  %216 = vmatpush2.xpose.msra.mxu0 0.0
  %217 = vmatprep.subr.mxu0 0.0
  %218 = vmatpush2.xpose.msra.mxu0 0.0
  %219 = vmatprep.subr.mxu0 0.0
  %220 = vmatpush2.xpose.msra.mxu0 0.0
  %221 = vmatprep.subr.mxu0 0.0
  %222 = vmatpush2.xpose.msra.mxu0 0.0
  %223 = vmatprep.subr.mxu0 0.0
  %224 = vmatpush2.xpose.msra.mxu0 0.0
  %225 = vmatprep.subr.mxu0 0.0
  %226 = vmatpush2.xpose.msra.mxu0 0.0
  %227 = vmatprep.subr.mxu0 0.0
  %228 = vmatpush2.xpose.msra.mxu0 0.0
  %229 = vmatprep.subr.mxu0 0.0
  %230 = vmatpush2.xpose.msra.mxu0 0.0
  %231 = vmatprep.subr.mxu0 0.0
  %232 = vmatpush2.xpose.msra.mxu0 0.0
  %233 = vmatprep.subr.mxu0 0.0
  %234 = vmatpush2.xpose.msra.mxu0 0.0
  %235 = vmatprep.subr.mxu0 0.0
  %236 = vmatpush2.xpose.msra.mxu0 0.0
  %237 = vmatprep.mubr.f32.mxu0 %v19
  %238 = vmatmul.mubr.f32.gmra.mxu0 %v18
  %v239 = vpop.f32.mrf.mxu0
  %v240 = vadd.f32 %v170, %v239
  %v241 = vpop.f32.mrf.mxu0
  %242 = vdwg.mxu0
  %vm243 = vcmask 64512
  %244 = vst.msk [vmem:[%s3] sm:$0xff] %vm243, %v240
  // Predicated region
  $region14: #{linear_classifier_forward.1} parent=0 // pred_check
    _
  $region15: #{linear_classifier_forward.1} parent=0 // pred_check_branch
    %246 = sbr.rel (0) target = $region17
  $region16: #{linear_classifier_forward.1} parent=0 // pred_region
    _
  $region17: #{linear_classifier_forward.1} parent=0 // pred_fallthru
    _
  // Predicated region
  $region18: #{linear_classifier_forward.1} parent=0 // pred_check
    _
  $region19: #{linear_classifier_forward.1} parent=0 // pred_check_branch
    %248 = sbr.rel (0) target = $region21
  $region20: #{linear_classifier_forward.1} parent=0 // pred_region
    _
  $region21: #{linear_classifier_forward.1} parent=0 // pred_fallthru
    _

</llo_original>
